<compile_context>
chip_gen: v5e
topology: v5e:2x2
jax: 0.10.0
libtpu: 0.0.40
codegen_flags: <defaults>
</compile_context>

<pallas_src>
import functools

import jax
import jax.numpy as jnp
from jax.experimental import pallas as pl
from jax.experimental.pallas import tpu as pltpu


_TARGET_BLOCK_BYTES = 8 << 20   # ~8 MiB per input block
_VMEM_LIMIT_BYTES = 48 << 20    # in+out double-buffered (<=32 MiB) + headroom


def _solarize_kernel(x_ref, o_ref, *, threshold, inv_scale):
    x = x_ref[...]
    # Exact torch branch condition and numerator; /255 folded into a multiply.
    sol = jnp.where(x * 255.0 > threshold, 255.0 - x, x)
    o_ref[...] = (sol * inv_scale).astype(o_ref.dtype)


def _min_sublane(dtype) -> int:
    # Minimum sublane tile by itemsize: fp32->8, bf16/fp16->16, int8/fp8->32.
    return {4: 8, 2: 16, 1: 32}.get(jnp.dtype(dtype).itemsize, 8)


def _pick_cols(n: int):
    """Largest lane-dense column count that divides n; else pad fallback."""
    for cols in (1024, 512, 256, 128):
        if n % cols == 0:
            return cols, False
    return 1024, True


def solarization(img: jax.Array, threshold: float = 128.0) -> jax.Array:
    """Applies solarization to `img` (any shape, float dtype)."""
    orig_shape = img.shape
    dtype = img.dtype
    itemsize = jnp.dtype(dtype).itemsize
    n = img.size

    # ---- layout: flatten -> (rows, cols) lane-dense slab (no pad if aligned) ----
    cols, needs_pad = _pick_cols(n)
    flat = img.reshape(-1)
    if needs_pad:
        # Fallback only when n is not a multiple of 128 (rare for image
        # tensors); this costs one extra HBM pass for the pad + final slice.
        padded_n = pl.cdiv(n, cols) * cols
        flat = jnp.pad(flat, (0, padded_n - n))
    else:
        padded_n = n
    rows = padded_n // cols
    slab = flat.reshape(rows, cols)

    # ---- block sizing: ~8 MiB blocks, dtype-aware sublane rounding ----
    sub = _min_sublane(dtype)
    max_block_rows = max(sub, (_TARGET_BLOCK_BYTES // (cols * itemsize)) // sub * sub)
    if rows <= max_block_rows:
        # Single block equal to the full array: exempt from (8,128) divisibility.
        block_rows = rows
        grid = (1,)
    else:
        block_rows = max_block_rows
        # Ragged last block (if rows % block_rows != 0) is handled by Pallas:
        # out-of-bounds loads feed only out-of-bounds stores, which are dropped.
        grid = (pl.cdiv(rows, block_rows),)

    kernel = functools.partial(
        _solarize_kernel, threshold=float(threshold), inv_scale=1.0 / 255.0
    )

    cost = pl.CostEstimate(
        flops=3 * padded_n,
        transcendentals=0,
        bytes_accessed=2 * padded_n * itemsize,
    )

    out_slab = pl.pallas_call(
        kernel,
        out_shape=jax.ShapeDtypeStruct((rows, cols), dtype),
        grid_spec=pltpu.PrefetchScalarGridSpec(
            num_scalar_prefetch=0,
            grid=grid,
            in_specs=[pl.BlockSpec((block_rows, cols), lambda i: (i, 0))],
            out_specs=pl.BlockSpec((block_rows, cols), lambda i: (i, 0)),
        ),
        compiler_params=pltpu.CompilerParams(
            dimension_semantics=("parallel",),
            vmem_limit_bytes=_VMEM_LIMIT_BYTES,
        ),
        cost_estimate=cost,
    )(slab)

    out = out_slab.reshape(-1)
    if needs_pad:
        out = out[:n]
    return out.reshape(orig_shape)


if __name__ == "__main__":
    key = jax.random.PRNGKey(0)

    # Aligned path (n = 2048, multiple of 128 -> no pad, single full block).
    x = jax.random.uniform(key, (2, 4, 16, 16), dtype=jnp.float32)
    out = jax.block_until_ready(solarization(x, threshold=128.0))
    ref = jnp.where(x * 255.0 > 128.0, 255.0 - x, x) / 255.0
    assert out.shape == x.shape and out.dtype == x.dtype
    assert jnp.allclose(out, ref, atol=1e-6), "mismatch vs reference (aligned)"

    # Misaligned fallback path (n = 105, not a multiple of 128 -> pad path).
    y = jax.random.uniform(jax.random.PRNGKey(1), (3, 5, 7), dtype=jnp.float32)
    out_y = jax.block_until_ready(solarization(y, threshold=128.0))
    ref_y = jnp.where(y * 255.0 > 128.0, 255.0 - y, y) / 255.0
    assert out_y.shape == y.shape and out_y.dtype == y.dtype
    assert jnp.allclose(out_y, ref_y, atol=1e-6), "mismatch vs reference (padded)"

    print("KERNEL_OK")
</pallas_src>

<mosaic_0001>
module attributes {stable_mosaic.version = 11 : i64} {
  func.func @_solarize_kernel(%arg0: i32, %arg1: memref<2x1024xf32, #tpu.memory_space<vmem>>, %arg2: memref<2x1024xf32, #tpu.memory_space<vmem>>) attributes {dimension_semantics = [#tpu.dimension_semantics<parallel>], iteration_bounds = array<i64: 1>, scalar_prefetch = 0 : i64, scratch_operands = 0 : i64, tpu.core_type = #tpu.core_type<tc>, window_params = [{transform_indices = @transform_0, window_bounds = array<i64: 2, 1024>}, {transform_indices = @transform_1, window_bounds = array<i64: 2, 1024>}]} {
    %c0 = arith.constant 0 : index
    %c0_0 = arith.constant 0 : index
    %0 = vector.load %arg1[%c0, %c0_0] : memref<2x1024xf32, #tpu.memory_space<vmem>>, vector<2x1024xf32>
    %cst = arith.constant 2.550000e+02 : f32
    %1 = vector.broadcast %cst : f32 to vector<2x1024xf32>
    %2 = arith.mulf %0, %1 : vector<2x1024xf32>
    %cst_1 = arith.constant 1.280000e+02 : f32
    %3 = vector.broadcast %cst_1 : f32 to vector<2x1024xf32>
    %4 = arith.cmpf ogt, %2, %3 : vector<2x1024xf32>
    %cst_2 = arith.constant 2.550000e+02 : f32
    %5 = vector.broadcast %cst_2 : f32 to vector<2x1024xf32>
    %6 = arith.subf %5, %0 : vector<2x1024xf32>
    %7 = arith.select %4, %6, %0 : vector<2x1024xi1>, vector<2x1024xf32>
    %cst_3 = arith.constant 0.00392156886 : f32
    %8 = vector.broadcast %cst_3 : f32 to vector<2x1024xf32>
    %9 = arith.mulf %7, %8 : vector<2x1024xf32>
    %c0_4 = arith.constant 0 : index
    %c0_5 = arith.constant 0 : index
    %10 = vector.load %arg2[%c0_4, %c0_5] : memref<2x1024xf32, #tpu.memory_space<vmem>>, vector<2x1024xf32>
    tpu.vector_store %arg2[%c0_4, %c0_5], %9 {strides = array<i32>} : memref<2x1024xf32, #tpu.memory_space<vmem>>, vector<2x1024xf32>,
    return
  }
  func.func @transform_0(%arg0: i32) -> (i32, i32) {
    %c0_i32 = arith.constant 0 : i32
    %c0_i32_0 = arith.constant 0 : i32
    return %arg0, %c0_i32 : i32, i32
  }
  func.func @transform_1(%arg0: i32) -> (i32, i32) {
    %c0_i32 = arith.constant 0 : i32
    %c0_i32_0 = arith.constant 0 : i32
    return %arg0, %c0_i32 : i32, i32
  }
}

</mosaic_0001>

<llo_original>
// kernel: tpu_custom_call.1
$region0: #{tpu_custom_call.1}
  #allocation0 [shape = 'u32[]', space=smem, size = 0x4, offset = 0x4, fixed_abs, tag = 'smem constant byte address 0x4 - core index']
  #allocation1 [shape = 'u32[72,128]{1,0:T(1,128)}', space=vmem, size = 0x9000, scoped, tag = 'internal scratch']
  %s0 = inlined_call_operand.hbm [shape: f32[2,1024], index: 0, kind: input, shape index: {}]
  %s1 = inlined_call_operand.hbm [shape: f32[2,1024], index: 1, kind: output, shape index: {}]
  %s2 = sld [smem:[#allocation0]]
  $region18: #{tpu_custom_call.1} parent=0
    _
  %s4 = ssub.s32 1, %s2
  %s5 = scalar_select 0, %s4, %s2
  $region1: #{tpu_custom_call.1} parent=0
    #allocation2 [shape = 'u8[8192]{0}', space=vmem, size = 0x2000, scoped, tag = 'input window, operand 0, single buffered']
    #allocation3 [shape = 's32[1]{0}', space=sflag, size = 0x4, scoped, tag = 'scoped memory for tpu_custom_call.1']
    #allocation4 [shape = 's32[1]{0}', space=sflag, size = 0x4, scoped, tag = 'scoped memory for tpu_custom_call.1']
    #allocation5 [shape = 'u8[8192]{0}', space=vmem, size = 0x2000, scoped, tag = 'output window, operand 0, single buffered']
    %6 = vsyncpa [#allocation3], 0
    %7 = vsyncpa [#allocation4], 0
    // Predicated region
    $region2: #{tpu_custom_call.1} parent=1 // pred_check
      _
    $region3: #{tpu_custom_call.1} parent=1 // pred_check_branch
      %9 = sbr.rel (0) target = $region5
    $region4: #{tpu_custom_call.1} parent=1 // pred_region
      %11 = vsyncadd [#allocation3], 0
      %s13 = sshll.u32 %s0, 4
      %s14 = int_to_ptr.hbm [resolvable:$true] %s13
      %s15 = sshll.u32 [#allocation2], 4
      %s16 = int_to_ptr.vmem [resolvable:$true] %s15
      %18 = dma.hbm_to_vmem [thread:$0]  %s14, 256, %s16, [#allocation3]
    $region5: #{tpu_custom_call.1} parent=1 // pred_fallthru
      _
    // Predicated region
    $region6: #{tpu_custom_call.1} parent=1 // pred_check
      _
    $region7: #{tpu_custom_call.1} parent=1 // pred_check_branch
      %20 = sbr.rel (0) target = $region9
    $region8: #{tpu_custom_call.1} parent=1 // pred_region
      %22 = dma.done [#allocation3], 256
    $region9: #{tpu_custom_call.1} parent=1 // pred_fallthru
      _
    %v23 = vld [vmem:[#allocation2] sm:$0xff]
    %v24 = vld [vmem:[#allocation2 + $0x8] sm:$0xff]
    %v25 = vmul.f32 %v23, 255.0
    %v26 = vmul.f32 %v24, 255.0
    %vm27 = vcmp.gt.f32.partialorder %v25, 128.0
    %vm28 = vcmp.gt.f32.partialorder %v26, 128.0
    %v29 = vsub.f32 255.0, %v23
    %v30 = vsub.f32 255.0, %v24
    %v31 = vsel %vm27, %v29, %v23
    %v32 = vsel %vm28, %v30, %v24
    %v33 = vmul.f32 %v31, 0.003921569
    %v34 = vmul.f32 %v32, 0.003921569
    %35 = vst [vmem:[#allocation5] sm:$0xff] %v33
    %36 = vst [vmem:[#allocation5 + $0x8] sm:$0xff] %v34
    // Predicated region
    $region10: #{tpu_custom_call.1} parent=1 // pred_check
      _
    $region11: #{tpu_custom_call.1} parent=1 // pred_check_branch
      %38 = sbr.rel (0) target = $region13
    $region12: #{tpu_custom_call.1} parent=1 // pred_region
      %40 = vsyncadd [#allocation4], 0
      %s42 = sshll.u32 [#allocation5], 4
      %s43 = int_to_ptr.vmem [resolvable:$true] %s42
      %s44 = sshll.u32 %s1, 4
      %s45 = int_to_ptr.hbm [resolvable:$true] %s44
      %47 = dma.vmem_to_hbm [thread:$0]  %s43, 256, %s45, [#allocation4]
    $region13: #{tpu_custom_call.1} parent=1 // pred_fallthru
      _
    // Predicated region
    $region14: #{tpu_custom_call.1} parent=1 // pred_check
      _
    $region15: #{tpu_custom_call.1} parent=1 // pred_check_branch
      %49 = sbr.rel (0) target = $region17
    $region16: #{tpu_custom_call.1} parent=1 // pred_region
      %51 = dma.done [#allocation4], 256
    $region17: #{tpu_custom_call.1} parent=1 // pred_fallthru
      _
    %52 = vsyncpa [#allocation3], 1
    %53 = vsyncpa [#allocation4], 1

</llo_original>
